<compile_context>
chip_gen: v5e
topology: v5e:2x2
jax: 0.10.0
libtpu: 0.0.40
codegen_flags: <defaults>
</compile_context>

<pallas_src>
import functools
import math

import numpy as np
import jax
import jax.numpy as jnp
from jax.experimental import pallas as pl
from jax.experimental.pallas import tpu as pltpu

N_CLASS = 14
LAMBDA_HNM = 0.2
LAMBDA_NOOBJ = 0.001
HARD_NUM = 256

_LANES = 128
_ACC_ROWS = 64          # small VMEM accumulator (>=8 rows keeps ILP in the adds)
_NEG_FILL = -1e30       # softplus(-1e30) == 0.0 exactly in f32 (rare lane-pad fallback)


def _round_up(x, m):
    return ((x + m - 1) // m) * m


def _device_hint():
    """(n_tensorcores, tile_rows) per TPU generation.

    v7x: 2 TCs/chip (engaged via CORE_PARALLEL) + 3.2 TB/s HBM -> 8192-row
         (4 MiB) tiles so the ~0.35us/step overhead stays amortized.
    v6e: 1 TC, ~1.4 TB/s -> 4096-row (2 MiB) tiles.
    v5e / unknown: 1 TC, ~0.8 TB/s -> 2048-row tiles (already amortized).
    """
    kind = ""
    try:
        kind = (jax.devices()[0].device_kind or "").lower()
    except Exception:
        pass
    if "v7" in kind or "7x" in kind or "tpu7" in kind:
        return 2, 8192
    if "v6" in kind:
        return 1, 4096
    return 1, 2048


# ----------------------------------------------------------------------------
# Kernel 1: tiled sum of softplus(x) == sum of BCEWithLogits(x, 0)
# ----------------------------------------------------------------------------
def _softplus_sum_kernel(x_ref, o_ref, acc_ref, *, rows, steps, tile_rows,
                         mask_from, total_tiles):
    p = pl.program_id(0)          # TensorCore slice (CORE_PARALLEL on v7x)
    s = pl.program_id(1)          # sequential reduction steps within the slice

    @pl.when(s == 0)
    def _():
        acc_ref[...] = jnp.zeros_like(acc_ref)

    x = x_ref[...]                                               # (tile_rows, 128) f32
    sp = jnp.maximum(x, 0.0) + jnp.log1p(jnp.exp(-jnp.abs(x)))   # BCEWithLogits(x, 0)

    acc_rows = acc_ref.shape[0]

    def _accum(v):
        # fold the tile into the small accumulator: pure VPU adds; only
        # acc_rows x 128 of VMEM stores per step instead of a full-tile acc.
        acc_ref[...] += v.reshape(-1, acc_rows, _LANES).sum(axis=0)

    tile_idx = p * steps + s      # logical (unclamped) tile index

    if mask_from >= total_tiles:
        # every tile is fully inside the array: plain accumulate (hot path).
        _accum(sp)
    else:
        @pl.when(tile_idx < mask_from)
        def _():
            _accum(sp)            # fully in-range tile: no iota / mask work

        @pl.when(tile_idx >= mask_from)
        def _():
            # ragged last tile (or a clamped duplicate on the second core):
            # mask rows outside the real array.  Must stay a select (NOT a
            # multiply) -- out-of-range VMEM rows hold garbage and
            # softplus(garbage) may be inf/nan.
            row0 = tile_idx * tile_rows
            row_idx = jax.lax.broadcasted_iota(jnp.int32, sp.shape, 0) + row0
            _accum(jnp.where(row_idx < rows, sp, 0.0))

    @pl.when(s == pl.num_programs(1) - 1)
    def _():
        # one lane-dense (1,1,128) store per slice; the tiny cross-lane
        # reduction of the (n_slices,1,128) result happens in the jnp epilogue.
        o_ref[...] = jnp.sum(acc_ref[...], axis=0, keepdims=True)[None, :, :]


def _softplus_sum_call(x2, rows, ncores, tile_rows):
    n_tiles = pl.cdiv(rows, tile_rows)
    if ncores > n_tiles:
        ncores = 1
    steps = pl.cdiv(n_tiles, ncores)
    total_tiles = ncores * steps
    mask_from = (n_tiles - 1) if (rows % tile_rows) != 0 else n_tiles
    acc_rows = math.gcd(tile_rows, _ACC_ROWS)        # >= 8, divides tile_rows

    kernel = functools.partial(
        _softplus_sum_kernel, rows=rows, steps=steps, tile_rows=tile_rows,
        mask_from=mask_from, total_tiles=total_tiles)

    if ncores > 1 and hasattr(pltpu, "CORE_PARALLEL"):
        dim_sem = (pltpu.CORE_PARALLEL, pltpu.ARBITRARY)
    elif ncores > 1:
        dim_sem = ("parallel", "arbitrary")
    else:
        dim_sem = ("arbitrary", "arbitrary")

    out = pl.pallas_call(
        kernel,
        out_shape=jax.ShapeDtypeStruct((ncores, 1, _LANES), jnp.float32),
        grid_spec=pltpu.PrefetchScalarGridSpec(
            num_scalar_prefetch=0,
            grid=(ncores, steps),
            in_specs=[pl.BlockSpec(
                (tile_rows, _LANES),
                # clamp so the DMA window always starts inside the array; the
                # gated in-kernel mask zeroes any logically out-of-range tile.
                lambda p, s: (jnp.minimum(p * steps + s, n_tiles - 1), 0))],
            out_specs=pl.BlockSpec((1, 1, _LANES), lambda p, s: (p, 0, 0)),
            scratch_shapes=[pltpu.VMEM((acc_rows, _LANES), jnp.float32)],
        ),
        compiler_params=pltpu.CompilerParams(
            dimension_semantics=dim_sem,
            vmem_limit_bytes=32 * 1024 * 1024),
    )(x2)
    return jnp.sum(out)


def softplus_sum(x):
    """sum(log1p(exp(x))) over all elements via a tiled Pallas reduction."""
    x = jnp.asarray(x, jnp.float32).reshape(-1)       # contiguous reshape: free
    n = x.shape[0]
    if n % _LANES != 0:
        # rare fallback (< 128 pad elems) with a value whose f32 softplus is 0;
        # no full-array pad/copy on the common path.
        x = jnp.pad(x, (0, _LANES - n % _LANES), constant_values=_NEG_FILL)
    rows = x.shape[0] // _LANES
    x2 = x.reshape(rows, _LANES)                      # free (row-major) reshape

    ncores, dev_tile = _device_hint()
    tile_rows = min(dev_tile, _round_up(rows, 8))
    try:
        return _softplus_sum_call(x2, rows, ncores, tile_rows)
    except Exception:
        if ncores == 1:
            raise
        # conservative fallback if CORE_PARALLEL is rejected on this toolchain
        return _softplus_sum_call(x2, rows, 1, tile_rows)


# ----------------------------------------------------------------------------
# Kernel 2: losses over the gathered positive proposals, one lane-dense slab.
#   x slab : class logits in lanes [0, N_CLASS), reg preds in [N_CLASS, N_CLASS+3)
#   t slab : reg targets in lanes [N_CLASS, N_CLASS+3)
#   label  : (P_pad, 1) int32 positive class id, -1 for padding rows
# Output (8, 128): row 0 = pos_sum, row 1 = neg_sum, row 2 = reg_sum.
# ----------------------------------------------------------------------------
def _pos_loss_kernel(x_ref, t_ref, label_ref, o_ref):
    x = x_ref[...]
    sp = jnp.maximum(x, 0.0) + jnp.log1p(jnp.exp(-jnp.abs(x)))   # BCE(x, 0) = softplus(x)

    lane = jax.lax.broadcasted_iota(jnp.int32, x.shape, 1)
    label = label_ref[...]                                       # (P_pad, 1) int32
    valid = label >= 0                                           # pad rows are -1
    pos_mask = jnp.logical_and(lane == label, valid)
    neg_mask = jnp.logical_and(jnp.logical_and(lane < N_CLASS, lane != label), valid)

    pos_sum = jnp.sum(jnp.where(pos_mask, sp - x, 0.0))          # BCE(x, 1) = softplus(-x)
    neg_sum = jnp.sum(jnp.where(neg_mask, sp, 0.0))

    reg_mask = jnp.logical_and(lane >= N_CLASS, lane < N_CLASS + 3)
    z = jnp.tanh(x) - t_ref[...]          # padded rows: tanh(0) - 0 = 0 -> no contribution
    az = jnp.abs(z)
    sl1 = jnp.where(az < 1.0, 0.5 * z * z, az - 0.5)
    reg_sum = jnp.sum(jnp.where(reg_mask, sl1, 0.0))

    row = jax.lax.broadcasted_iota(jnp.int32, o_ref.shape, 0)
    o_ref[...] = jnp.where(row == 0, pos_sum,
                 jnp.where(row == 1, neg_sum,
                 jnp.where(row == 2, reg_sum, 0.0)))


# ----------------------------------------------------------------------------
# Wrapper reproducing HNM_propmap.forward
# ----------------------------------------------------------------------------
def hnm_propmap_loss(proposal_map, proposals):
    pm = jnp.asarray(proposal_map, jnp.float32)
    props = np.asarray(proposals, np.float32)
    assert props.ndim == 4 and props.shape[-1] == 7

    # ---- structural extraction: one vectorized numpy pass over the labels ----
    # TODO(synk): the per-(batch,anchor) "break on -100" parsing is inherently
    # data-dependent host control flow; vectorized with numpy masks here but it
    # stays off-device (non-jittable), like the torch loops.
    lab = props[..., -1]
    stop = lab == -100.0
    alive = np.cumsum(stop, axis=2) == 0              # boxes strictly before first -100
    pos_sel = alive & (lab >= 0.0)
    neg_sel = alive & (lab < 0.0)                     # hard negatives (never -100: not alive)

    bi, ai, ki = np.nonzero(pos_sel)
    P = int(bi.shape[0])
    assert P > 0, "need at least one positive proposal (torch module would crash otherwise)"
    pos_boxes = props[bi, ai, ki]                     # (P, 7)
    pos_c = pos_boxes[:, 0].astype(np.int32)
    pos_w = pos_boxes[:, 1].astype(np.int32)
    pos_h = pos_boxes[:, 2].astype(np.int32)
    pos_t = pos_boxes[:, 3:6].astype(np.float32)
    pos_l = pos_boxes[:, 6].astype(np.int32)

    hard_neg_count = np.bincount(
        (-1.0 - props[neg_sel][:, 6]).astype(np.int64), minlength=N_CLASS
    ).astype(np.int64)

    # ---- per-positive classification + regression losses: one Pallas call ----
    gathered = pm[bi, pos_c, pos_w, pos_h, ai, :]     # (P, 3 + N_CLASS)

    P_pad = max(8, _round_up(P, 8))
    x_slab = jnp.zeros((P_pad, _LANES), jnp.float32)
    x_slab = x_slab.at[:P, :N_CLASS].set(gathered[:, 3:])
    x_slab = x_slab.at[:P, N_CLASS:N_CLASS + 3].set(gathered[:, :3])

    t_np = np.zeros((P_pad, _LANES), np.float32)
    t_np[:P, N_CLASS:N_CLASS + 3] = pos_t
    lbl_np = np.full((P_pad, 1), -1, np.int32)
    lbl_np[:P, 0] = pos_l

    sums = pl.pallas_call(
        _pos_loss_kernel,
        out_shape=jax.ShapeDtypeStruct((8, _LANES), jnp.float32),
    )(x_slab, jnp.asarray(t_np), jnp.asarray(lbl_np))
    pos_sum, neg_sum, reg_sum = sums[0, 0], sums[1, 0], sums[2, 0]

    cl_pos_loss = pos_sum / P
    # matches the torch module exactly: mean over P*(n_class-1) elements, then
    # an extra 1/(n_class-1) prefactor.
    cl_neg_loss = (1.0 / (N_CLASS - 1)) * neg_sum / (P * (N_CLASS - 1))
    reg_loss = reg_sum / (3 * P)

    # ---- no-object regularizer over the full map (Pallas tiled reduction) ----
    regu_neg_loss = LAMBDA_NOOBJ * softplus_sum(pm) / pm.size

    # ---- hard-negative mining: one transpose + one batched top_k ----
    cl_hard_neg_loss = jnp.float32(0.0)
    if int(hard_neg_count.sum()) > 0:
        pm_cls = jnp.moveaxis(pm[..., 3:], -1, 0).reshape(N_CLASS, -1)   # (C, n)
        n_plane = int(pm_cls.shape[1])
        # clip k to the plane size (numpy reference silently truncates there).
        k_per_class = np.minimum(hard_neg_count * HARD_NUM, n_plane)
        k_max = int(k_per_class.max())
        # TODO(synk): top-k selection has no clean Pallas equivalent; kept in
        # plain JAX, but as a single batched lax.top_k instead of one
        # full-plane scan per class.
        top_vals, _ = jax.lax.top_k(pm_cls, k_max)                       # (C, k_max)
        col = np.arange(k_max)[None, :]
        sel = jnp.asarray((col < k_per_class[:, None]) & (hard_neg_count[:, None] > 0))
        sp_top = jnp.maximum(top_vals, 0.0) + jnp.log1p(jnp.exp(-jnp.abs(top_vals)))
        cl_hard_neg_loss = (LAMBDA_HNM * jnp.sum(jnp.where(sel, sp_top, 0.0))
                            / float(k_per_class.sum()))

    return cl_pos_loss + cl_neg_loss + cl_hard_neg_loss + regu_neg_loss + reg_loss


# ----------------------------------------------------------------------------
# numpy reference (direct transcription of the torch module, float64)
# ----------------------------------------------------------------------------
def _softplus_np(x):
    return np.maximum(x, 0.0) + np.log1p(np.exp(-np.abs(x)))


def reference_loss(proposal_map, proposals):
    pm = np.asarray(proposal_map, np.float64)
    props = np.asarray(proposals, np.float64)
    cl_pos, cl_neg, reg_p, reg_t = [], [], [], []
    hard_neg_count = np.zeros((N_CLASS,), np.int64)
    B, A = props.shape[0], props.shape[1]
    for i in range(B):
        for a in range(A):
            for bbox in props[i, a]:
                lab = bbox[-1]
                c, w, h = int(bbox[0]), int(bbox[1]), int(bbox[2])
                if lab == -100:
                    break
                elif lab >= 0:
                    l = int(lab)
                    cl_pos.append(pm[i, c, w, h, a, 3 + l:4 + l])
                    cl_neg.append(pm[i, c, w, h, a, 3:3 + l])
                    cl_neg.append(pm[i, c, w, h, a, 4 + l:])
                    reg_p.append(pm[i, c, w, h, a, :3])
                    reg_t.append(bbox[3:-1])
                else:
                    hard_neg_count[-1 - int(lab)] += 1
    cl_pos = np.concatenate(cl_pos, 0)
    cl_neg = np.concatenate(cl_neg, 0)
    cl_pos_loss = np.mean(_softplus_np(-cl_pos))
    cl_neg_loss = 1.0 / (N_CLASS - 1) * np.mean(_softplus_np(cl_neg))
    cl_hard = 0.0
    hn = []
    for c in range(N_CLASS):
        if hard_neg_count[c] != 0:
            cur = pm[:, :, :, :, :, 3 + c].reshape(-1)
            k = int(hard_neg_count[c]) * HARD_NUM
            hn.append(np.sort(cur)[::-1][:k])
    if hn:
        hn = np.concatenate(hn, 0)
        cl_hard = LAMBDA_HNM * np.mean(_softplus_np(hn))
    regu = LAMBDA_NOOBJ * np.mean(_softplus_np(pm))
    z = np.tanh(np.stack(reg_p, 0)) - np.stack(reg_t, 0)
    az = np.abs(z)
    reg_loss = np.mean(np.where(az < 1.0, 0.5 * z * z, az - 0.5))
    return cl_pos_loss + cl_neg_loss + cl_hard + regu + reg_loss


if __name__ == "__main__":
    key = jax.random.PRNGKey(0)
    B, C, W, H, A = 2, 4, 8, 8, 3
    proposal_map = jax.random.normal(key, (B, C, W, H, A, 3 + N_CLASS), dtype=jnp.float32)

    PAD = [0.0] * 6 + [-100.0]
    proposals = np.array([
        [  # batch 0
            [[1, 2, 3, 0.1, -0.2, 0.3, 5], [0, 4, 1, 0.0, 0.0, 0.0, -3], PAD, PAD],
            [[3, 7, 0, -0.5, 0.2, 0.0, 0], PAD, PAD, PAD],
            [[2, 1, 6, 0.3, 0.3, -0.3, 13], [1, 5, 5, 0.0, 0.0, 0.0, -14], PAD, PAD],
        ],
        [  # batch 1
            [[0, 0, 0, 0.2, 0.1, 0.0, 7], PAD, PAD, PAD],
            [[3, 6, 7, 0.0, 0.0, 0.0, -1], [2, 2, 2, 0.1, 0.2, 0.3, 3], PAD, PAD],
            [PAD, PAD, PAD, PAD],
        ],
    ], dtype=np.float32)

    loss = hnm_propmap_loss(proposal_map, proposals)
    loss = jax.block_until_ready(loss)

    ref = reference_loss(np.asarray(proposal_map), proposals)
    assert np.allclose(float(loss), float(ref), rtol=1e-3, atol=1e-3), (float(loss), float(ref))
    print("KERNEL_OK")
</pallas_src>

<mosaic_0001>
module attributes {stable_mosaic.version = 11 : i64} {
  func.func @_pos_loss_kernel(%arg0: memref<8x128xf32, #tpu.memory_space<vmem>>, %arg1: memref<8x128xf32, #tpu.memory_space<vmem>>, %arg2: memref<8x1xi32, #tpu.memory_space<vmem>>, %arg3: memref<8x128xf32, #tpu.memory_space<vmem>>) attributes {dimension_semantics = [], scalar_prefetch = 0 : i64, scratch_operands = 0 : i64, tpu.core_type = #tpu.core_type<tc>} {
    %c0 = arith.constant 0 : index
    %c0_0 = arith.constant 0 : index
    %0 = vector.load %arg0[%c0, %c0_0] : memref<8x128xf32, #tpu.memory_space<vmem>>, vector<8x128xf32>
    %cst = arith.constant 0.000000e+00 : f32
    %1 = vector.broadcast %cst : f32 to vector<8x128xf32>
    %2 = arith.maximumf %0, %1 : vector<8x128xf32>
    %3 = math.absf %0 : vector<8x128xf32>
    %cst_1 = arith.constant 0.000000e+00 : f32
    %4 = vector.broadcast %cst_1 : f32 to vector<8x128xf32>
    %5 = arith.subf %4, %3 : vector<8x128xf32>
    %6 = math.exp %5 : vector<8x128xf32>
    %7 = math.log1p %6 : vector<8x128xf32>
    %8 = arith.addf %2, %7 : vector<8x128xf32>
    %9 = tpu.iota {dimensions = array<i32: 1>} : vector<8x128xi32>
    %c0_2 = arith.constant 0 : index
    %c0_3 = arith.constant 0 : index
    %10 = vector.load %arg2[%c0_2, %c0_3] : memref<8x1xi32, #tpu.memory_space<vmem>>, vector<8x1xi32>
    %c0_i32 = arith.constant 0 : i32
    %11 = vector.broadcast %c0_i32 : i32 to vector<8x1xi32>
    %12 = arith.cmpi sge, %10, %11 : vector<8x1xi32>
    %13 = vector.broadcast %10 : vector<8x1xi32> to vector<8x128xi32>
    %14 = arith.cmpi eq, %9, %13 : vector<8x128xi32>
    %15 = vector.broadcast %12 : vector<8x1xi1> to vector<8x128xi1>
    %16 = arith.andi %14, %15 : vector<8x128xi1>
    %c14_i32 = arith.constant 14 : i32
    %17 = vector.broadcast %c14_i32 : i32 to vector<8x128xi32>
    %18 = arith.cmpi slt, %9, %17 : vector<8x128xi32>
    %19 = vector.broadcast %10 : vector<8x1xi32> to vector<8x128xi32>
    %20 = arith.cmpi ne, %9, %19 : vector<8x128xi32>
    %21 = arith.andi %18, %20 : vector<8x128xi1>
    %22 = vector.broadcast %12 : vector<8x1xi1> to vector<8x128xi1>
    %23 = arith.andi %21, %22 : vector<8x128xi1>
    %24 = arith.subf %8, %0 : vector<8x128xf32>
    %cst_4 = arith.constant 0.000000e+00 : f32
    %25 = vector.broadcast %cst_4 : f32 to vector<8x128xf32>
    %26 = arith.select %16, %24, %25 : vector<8x128xi1>, vector<8x128xf32>
    %27 = vector.shape_cast %26 : vector<8x128xf32> to vector<1x8x128xf32>
    %cst_5 = arith.constant dense<0.000000e+00> : vector<1xf32>
    %28 = vector.multi_reduction <add>, %27, %cst_5 [1, 2] : vector<1x8x128xf32> to vector<1xf32>
    %29 = vector.shape_cast %28 : vector<1xf32> to vector<1x1x1xf32>
    %30 = vector.extract %29[0, 0, 0] : f32 from vector<1x1x1xf32>
    %cst_6 = arith.constant 0.000000e+00 : f32
    %31 = vector.broadcast %cst_6 : f32 to vector<8x128xf32>
    %32 = arith.select %23, %8, %31 : vector<8x128xi1>, vector<8x128xf32>
    %33 = vector.shape_cast %32 : vector<8x128xf32> to vector<1x8x128xf32>
    %cst_7 = arith.constant dense<0.000000e+00> : vector<1xf32>
    %34 = vector.multi_reduction <add>, %33, %cst_7 [1, 2] : vector<1x8x128xf32> to vector<1xf32>
    %35 = vector.shape_cast %34 : vector<1xf32> to vector<1x1x1xf32>
    %36 = vector.extract %35[0, 0, 0] : f32 from vector<1x1x1xf32>
    %c14_i32_8 = arith.constant 14 : i32
    %37 = vector.broadcast %c14_i32_8 : i32 to vector<8x128xi32>
    %38 = arith.cmpi sge, %9, %37 : vector<8x128xi32>
    %c17_i32 = arith.constant 17 : i32
    %39 = vector.broadcast %c17_i32 : i32 to vector<8x128xi32>
    %40 = arith.cmpi slt, %9, %39 : vector<8x128xi32>
    %41 = arith.andi %38, %40 : vector<8x128xi1>
    %42 = math.tanh %0 : vector<8x128xf32>
    %c0_9 = arith.constant 0 : index
    %c0_10 = arith.constant 0 : index
    %43 = vector.load %arg1[%c0_9, %c0_10] : memref<8x128xf32, #tpu.memory_space<vmem>>, vector<8x128xf32>
    %44 = arith.subf %42, %43 : vector<8x128xf32>
    %45 = math.absf %44 : vector<8x128xf32>
    %cst_11 = arith.constant 1.000000e+00 : f32
    %46 = vector.broadcast %cst_11 : f32 to vector<8x128xf32>
    %47 = arith.cmpf olt, %45, %46 : vector<8x128xf32>
    %cst_12 = arith.constant 5.000000e-01 : f32
    %48 = vector.broadcast %cst_12 : f32 to vector<8x128xf32>
    %49 = arith.mulf %48, %44 : vector<8x128xf32>
    %50 = arith.mulf %49, %44 : vector<8x128xf32>
    %cst_13 = arith.constant 5.000000e-01 : f32
    %51 = vector.broadcast %cst_13 : f32 to vector<8x128xf32>
    %52 = arith.subf %45, %51 : vector<8x128xf32>
    %53 = arith.select %47, %50, %52 : vector<8x128xi1>, vector<8x128xf32>
    %cst_14 = arith.constant 0.000000e+00 : f32
    %54 = vector.broadcast %cst_14 : f32 to vector<8x128xf32>
    %55 = arith.select %41, %53, %54 : vector<8x128xi1>, vector<8x128xf32>
    %56 = vector.shape_cast %55 : vector<8x128xf32> to vector<1x8x128xf32>
    %cst_15 = arith.constant dense<0.000000e+00> : vector<1xf32>
    %57 = vector.multi_reduction <add>, %56, %cst_15 [1, 2] : vector<1x8x128xf32> to vector<1xf32>
    %58 = vector.shape_cast %57 : vector<1xf32> to vector<1x1x1xf32>
    %59 = vector.extract %58[0, 0, 0] : f32 from vector<1x1x1xf32>
    %60 = tpu.iota {dimensions = array<i32: 0>} : vector<8x128xi32>
    %c0_i32_16 = arith.constant 0 : i32
    %61 = vector.broadcast %c0_i32_16 : i32 to vector<8x128xi32>
    %62 = arith.cmpi eq, %60, %61 : vector<8x128xi32>
    %c1_i32 = arith.constant 1 : i32
    %63 = vector.broadcast %c1_i32 : i32 to vector<8x128xi32>
    %64 = arith.cmpi eq, %60, %63 : vector<8x128xi32>
    %c2_i32 = arith.constant 2 : i32
    %65 = vector.broadcast %c2_i32 : i32 to vector<8x128xi32>
    %66 = arith.cmpi eq, %60, %65 : vector<8x128xi32>
    %cst_17 = arith.constant 0.000000e+00 : f32
    %67 = vector.broadcast %59 : f32 to vector<8x128xf32>
    %68 = vector.broadcast %cst_17 : f32 to vector<8x128xf32>
    %69 = arith.select %66, %67, %68 : vector<8x128xi1>, vector<8x128xf32>
    %70 = vector.broadcast %36 : f32 to vector<8x128xf32>
    %71 = arith.select %64, %70, %69 : vector<8x128xi1>, vector<8x128xf32>
    %72 = vector.broadcast %30 : f32 to vector<8x128xf32>
    %73 = arith.select %62, %72, %71 : vector<8x128xi1>, vector<8x128xf32>
    %c0_18 = arith.constant 0 : index
    %c0_19 = arith.constant 0 : index
    %74 = vector.load %arg3[%c0_18, %c0_19] : memref<8x128xf32, #tpu.memory_space<vmem>>, vector<8x128xf32>
    tpu.vector_store %arg3[%c0_18, %c0_19], %73 {strides = array<i32>} : memref<8x128xf32, #tpu.memory_space<vmem>>, vector<8x128xf32>,
    return
  }
}

</mosaic_0001>

<llo_original>
// kernel: tpu_custom_call.1
$region0: #{tpu_custom_call.1}
  #allocation0 [shape = 'u32[]', space=smem, size = 0x4, offset = 0x4, fixed_abs, tag = 'smem constant byte address 0x4 - core index']
  #allocation1 [shape = 'u32[72,128]{1,0:T(1,128)}', space=vmem, size = 0x9000, scoped, tag = 'internal scratch']
  %s0 = inlined_call_operand.vmem [shape: f32[8,128], index: 0, kind: input, shape index: {}]
  %s1 = inlined_call_operand.hbm [shape: f32[8,128], index: 1, kind: input, shape index: {}]
  %s2 = inlined_call_operand.vmem [shape: s32[8,1], index: 2, kind: input, shape index: {}]
  %s3 = inlined_call_operand.hbm [shape: f32[8,128], index: 3, kind: output, shape index: {}]
  %s4 = sld [smem:[#allocation0]]
  $region26: #{tpu_custom_call.1} parent=0
    _
  %s6 = ssub.s32 1, %s4
  %s7 = scalar_select 0, %s6, %s4
  $region1: #{tpu_custom_call.1} parent=0
    #allocation2 [shape = 'u8[4096]{0}', space=vmem, size = 0x1000, scoped, tag = 'input window, operand 1, single buffered']
    #allocation3 [shape = 's32[1]{0}', space=sflag, size = 0x4, scoped, tag = 'scoped memory for tpu_custom_call.1']
    #allocation4 [shape = 's32[1]{0}', space=sflag, size = 0x4, scoped, tag = 'scoped memory for tpu_custom_call.1']
    #allocation5 [shape = 'u8[4096]{0}', space=vmem, size = 0x1000, scoped, tag = 'output window, operand 0, single buffered']
    %8 = vsyncpa [#allocation3], 0
    %9 = vsyncpa [#allocation4], 0
    // Predicated region
    $region2: #{tpu_custom_call.1} parent=1 // pred_check
      _
    $region3: #{tpu_custom_call.1} parent=1 // pred_check_branch
      %11 = sbr.rel (0) target = $region5
    $region4: #{tpu_custom_call.1} parent=1 // pred_region
      _
    $region5: #{tpu_custom_call.1} parent=1 // pred_fallthru
      _
    // Predicated region
    $region6: #{tpu_custom_call.1} parent=1 // pred_check
      _
    $region7: #{tpu_custom_call.1} parent=1 // pred_check_branch
      %13 = sbr.rel (0) target = $region9
    $region8: #{tpu_custom_call.1} parent=1 // pred_region
      %15 = vsyncadd [#allocation3], 0
      %s17 = sshll.u32 %s1, 4
      %s18 = int_to_ptr.hbm [resolvable:$true] %s17
      %s19 = sshll.u32 [#allocation2], 4
      %s20 = int_to_ptr.vmem [resolvable:$true] %s19
      %22 = dma.hbm_to_vmem [thread:$0]  %s18, 128, %s20, [#allocation3]
    $region9: #{tpu_custom_call.1} parent=1 // pred_fallthru
      _
    // Predicated region
    $region10: #{tpu_custom_call.1} parent=1 // pred_check
      _
    $region11: #{tpu_custom_call.1} parent=1 // pred_check_branch
      %24 = sbr.rel (0) target = $region13
    $region12: #{tpu_custom_call.1} parent=1 // pred_region
      _
    $region13: #{tpu_custom_call.1} parent=1 // pred_fallthru
      _
    // Predicated region
    $region14: #{tpu_custom_call.1} parent=1 // pred_check
      _
    $region15: #{tpu_custom_call.1} parent=1 // pred_check_branch
      %26 = sbr.rel (0) target = $region17
    $region16: #{tpu_custom_call.1} parent=1 // pred_region
      %28 = dma.done [#allocation3], 128
    $region17: #{tpu_custom_call.1} parent=1 // pred_fallthru
      _
    %v29 = vld [vmem:[%s0] sm:$0xff]
    %v30 = vmax.f32 %v29, 0.0
    %v31 = vand.u32 2147483647, %v29
    %v32 = vsub.f32 0.0, %v31
    %v33 = vmul.f32 %v32, 1.442695
    %v34 = vpow.pop %v33
    %v35 = vadd.f32 %v34, 1.0
    %v36 = vlog2.pop %v35
    %v37 = vmul.f32 %v36, 0.6931472
    %v38 = vmul.f32 -0.5, %v34
    %v39 = vadd.f32 %v38, 1.0
    %v40 = vmul.f32 %v39, %v34
    %v41 = vand.u32 2147483647, %v34
    %vm42 = vcmp.lt.f32.partialorder %v41, 0.0004427343
    %v43 = vsel %vm42, %v40, %v37
    %v44 = vadd.f32 %v30, %v43
    %v45 = vlaneseq
    %v46 = vand.u32 %v45, 127
    %v47 = vld [vmem:[%s2] sm:$0xff]
    %vm48 = vcmp.ge.s32.totalorder %v47, 0
    %49 = vset.pattern.permute.xlu0 0
    %50 = vperm.xlu0 %49, %v47
    %v51 = vpop.permute.xlu0 %50
    %vm52 = vcmp.eq.s32.totalorder %v46, %v51
    %v53 = vsel %vm48, 1, 0
    %54 = vset.pattern.permute.xlu0 0
    %55 = vperm.xlu0 %54, %v53
    %v56 = vpop.permute.xlu0 %55
    %vm57 = vcmp.eq.s32.totalorder %v56, 1
    %vm58 = vmand %vm52, %vm57
    %vm59 = vcmp.lt.s32.totalorder %v46, 14
    %vm60 = vcmp.ne.s32.totalorder %v46, %v51
    %vm61 = vmand %vm59, %vm60
    %vm62 = vmand %vm61, %vm57
    %v63 = vsub.f32 %v44, %v29
    %v64 = vsel %vm58, %v63, 0.0
    %65 = vadd.xlane.f32.xlu0 %v64
    %v66 = vpop.xlane.xlu0 %65
    %v67 = vrot.slane %v66, 4
    %v68 = vadd.f32 %v66, %v67
    %v69 = vrot.slane %v68, 2
    %v70 = vadd.f32 %v68, %v69
    %v71 = vrot.slane %v70, 1
    %v72 = vadd.f32 %v70, %v71
    %s73 = vtos %v72
    %v74 = vsel %vm62, %v44, 0.0
    %75 = vadd.xlane.f32.xlu0 %v74
    %v76 = vpop.xlane.xlu0 %75
    %v77 = vrot.slane %v76, 4
    %v78 = vadd.f32 %v76, %v77
    %v79 = vrot.slane %v78, 2
    %v80 = vadd.f32 %v78, %v79
    %v81 = vrot.slane %v80, 1
    %v82 = vadd.f32 %v80, %v81
    %s83 = vtos %v82
    %vm84 = vcmp.ge.s32.totalorder %v46, 14
    %vm85 = vcmp.lt.s32.totalorder %v46, 17
    %vm86 = vmand %vm84, %vm85
    %v87 = vtanh.pop %v29
    %v88 = vld [vmem:[#allocation2] sm:$0xff]
    %v89 = vsub.f32 %v87, %v88
    %v90 = vand.u32 2147483647, %v89
    %vm91 = vcmp.lt.f32.partialorder %v90, 1.0
    %v92 = vmul.f32 %v89, 0.5
    %v93 = vmul.f32 %v92, %v89
    %v94 = vsub.f32 %v90, 0.5
    %v95 = vsel %vm91, %v93, %v94
    %v96 = vsel %vm86, %v95, 0.0
    %97 = vadd.xlane.f32.xlu0 %v96
    %v98 = vpop.xlane.xlu0 %97
    %v99 = vrot.slane %v98, 4
    %v100 = vadd.f32 %v98, %v99
    %v101 = vrot.slane %v100, 2
    %v102 = vadd.f32 %v100, %v101
    %v103 = vrot.slane %v102, 1
    %v104 = vadd.f32 %v102, %v103
    %s105 = vtos %v104
    %v106 = vlaneseq
    %v107 = vshrl.u32 %v106, 7
    %vm108 = vcmp.eq.s32.totalorder %v107, 0
    %vm109 = vcmp.eq.s32.totalorder %v107, 1
    %vm110 = vcmp.eq.s32.totalorder %v107, 2
    %v111 = vstv %s105
    %v112 = vsel %vm110, %v111, 0.0
    %v113 = vstv %s83
    %v114 = vsel %vm109, %v113, %v112
    %v115 = vstv %s73
    %v116 = vsel %vm108, %v115, %v114
    %117 = vst [vmem:[#allocation5] sm:$0xff] %v116
    // Predicated region
    $region18: #{tpu_custom_call.1} parent=1 // pred_check
      _
    $region19: #{tpu_custom_call.1} parent=1 // pred_check_branch
      %119 = sbr.rel (0) target = $region21
    $region20: #{tpu_custom_call.1} parent=1 // pred_region
      %121 = vsyncadd [#allocation4], 0
      %s123 = sshll.u32 [#allocation5], 4
      %s124 = int_to_ptr.vmem [resolvable:$true] %s123
      %s125 = sshll.u32 %s3, 4
      %s126 = int_to_ptr.hbm [resolvable:$true] %s125
      %128 = dma.vmem_to_hbm [thread:$0]  %s124, 128, %s126, [#allocation4]
    $region21: #{tpu_custom_call.1} parent=1 // pred_fallthru
      _
    // Predicated region
    $region22: #{tpu_custom_call.1} parent=1 // pred_check
      _
    $region23: #{tpu_custom_call.1} parent=1 // pred_check_branch
      %130 = sbr.rel (0) target = $region25
    $region24: #{tpu_custom_call.1} parent=1 // pred_region
      %132 = dma.done [#allocation4], 128
    $region25: #{tpu_custom_call.1} parent=1 // pred_fallthru
      _
    %133 = vsyncpa [#allocation3], 1
    %134 = vsyncpa [#allocation4], 1

</llo_original>
